<compile_context>
chip_gen: v5e
topology: v5e:2x2
jax: 0.10.0
libtpu: 0.0.40
codegen_flags: <defaults>
</compile_context>

<pallas_src>
import jax
import jax.numpy as jnp
from jax import lax
from jax.experimental import pallas as pl
from jax.experimental.pallas import tpu as pltpu

# ---- module hyper-parameters (mirrors the PyTorch script globals) ----------
IN_CHANNELS = 32            # in_channels
COMPRESSED_DIM = 8          # compressed_dim (== k)
N_CHANNEL = 2               # parm1
R = COMPRESSED_DIM / N_CHANNEL
TRAIN_SNR = 5.01187         # training_signal_noise_ratio

BATCH = 512                 # total samples in the example run
TILE_B = 256                # lane-dense batch tile (one grid step per v7x core)

# dot_general dims: contract last dim of both operands, i.e. A @ B^T.
_DN_RHS_T = (((1,), (1,)), ((), ()))


def rtn_kernel(x_ref,
               w1_ref, b1_ref, w2_ref, b2_ref,     # encoder
               w3_ref, b3_ref, w4_ref, b4_ref,     # decoder
               noise_ref,
               out_ref):
    # x_ref is the (TILE_B, C) batch-major tile.  The first layer contracts
    # over its feature axis directly (W @ X^T on the MXU), so activations are
    # channels-first (features on sublanes, batch on lanes) with no
    # materialized input transpose.
    h = lax.dot_general(w1_ref[...], x_ref[...], _DN_RHS_T,
                        preferred_element_type=jnp.float32) + b1_ref[...]   # (C, TB)
    h = jnp.maximum(h, 0.0)
    z = jnp.dot(w2_ref[...], h,
                preferred_element_type=jnp.float32) + b2_ref[...]           # (K, TB)

    # ---- power normalization: sqrt(C) * z / ||z||  (per column/sample) -----
    sumsq = jnp.sum(z * z, axis=0, keepdims=True)                           # (1, TB)
    # eps guard is an addition vs. torch (benign; only matters for z == 0).
    z = z * ((IN_CHANNELS ** 0.5) * lax.rsqrt(jnp.maximum(sumsq, 1e-12)))

    # ---- AWGN channel (noise streamed channels-first, no transpose) --------
    z = z + noise_ref[...]

    # ---- decoder: Linear -> ReLU -> Linear ---------------------------------
    h2 = jnp.dot(w3_ref[...], z,
                 preferred_element_type=jnp.float32) + b3_ref[...]          # (C, TB)
    h2 = jnp.maximum(h2, 0.0)
    y = jnp.dot(w4_ref[...], h2,
                preferred_element_type=jnp.float32) + b4_ref[...]           # (C, TB)

    # Fold the output transpose into the kernel (XLU slot is idle): the
    # source tile (32, TILE_B) is (8, 128)-aligned in both dims.
    out_ref[...] = y.T                                                       # (TB, C)


def rtn_forward(x, params, noise_cf, tile_b=TILE_B):
    """x: (B, C) f32, noise_cf: (K, B) f32 channels-first, params: PyTorch-layout
    weights (out, in) and biases (out, 1).  Returns (B, C) f32."""
    (w1, b1, w2, b2, w3, b3, w4, b4) = params
    B, C = x.shape
    K = COMPRESSED_DIM
    assert C == IN_CHANNELS
    assert noise_cf.shape == (K, B)
    assert B % tile_b == 0, "batch must be a multiple of the lane tile"

    resident = lambda shape: pl.BlockSpec(shape, lambda i: (0, 0))

    flops = 2 * B * (C * C + C * K + K * C + C * C)
    param_bytes = 4 * (C * C + C + K * C + K + C * K + C + C * C + C)
    cost = pl.CostEstimate(
        flops=flops,
        transcendentals=B,                                   # one rsqrt per sample
        bytes_accessed=4 * (B * C + K * B + B * C) + param_bytes)

    return pl.pallas_call(
        rtn_kernel,
        out_shape=jax.ShapeDtypeStruct((B, C), jnp.float32),
        grid=(B // tile_b,),
        in_specs=[
            pl.BlockSpec((tile_b, C), lambda i: (i, 0)),     # x tile (streams)
            resident((C, C)), resident((C, 1)),              # w1, b1 (VMEM-resident)
            resident((K, C)), resident((K, 1)),              # w2, b2
            resident((C, K)), resident((C, 1)),              # w3, b3
            resident((C, C)), resident((C, 1)),              # w4, b4
            pl.BlockSpec((K, tile_b), lambda i: (0, i)),     # noise tile (streams)
        ],
        out_specs=pl.BlockSpec((tile_b, C), lambda i: (i, 0)),
        compiler_params=pltpu.CompilerParams(
            dimension_semantics=("parallel",)),
        cost_estimate=cost,
    )(x, w1, b1, w2, b2, w3, b3, w4, b4, noise_cf)


def init_linear(key, fan_in, fan_out):
    """PyTorch-style uniform(-1/sqrt(fan_in), 1/sqrt(fan_in)).
    Weight kept in PyTorch (out, in) layout; bias as (out, 1)."""
    kw, kb = jax.random.split(key)
    bound = 1.0 / (fan_in ** 0.5)
    w = jax.random.uniform(kw, (fan_out, fan_in), jnp.float32, -bound, bound)
    b = jax.random.uniform(kb, (fan_out, 1), jnp.float32, -bound, bound)
    return w, b


def rtn_reference(x, params, noise_cf):
    """Plain-JAX reference mirroring the module's forward pass (batch-major)."""
    (w1, b1, w2, b2, w3, b3, w4, b4) = params
    h = jnp.maximum(x @ w1.T + b1.T, 0.0)
    z = h @ w2.T + b2.T                                       # (B, K)
    sumsq = jnp.sum(z * z, axis=-1, keepdims=True)
    z = z * ((IN_CHANNELS ** 0.5) * lax.rsqrt(jnp.maximum(sumsq, 1e-12)))
    z = z + noise_cf.T
    h2 = jnp.maximum(z @ w3.T + b3.T, 0.0)
    return h2 @ w4.T + b4.T


if __name__ == "__main__":
    root = jax.random.PRNGKey(0)
    kx, kn, k1, k2, k3, k4 = jax.random.split(root, 6)

    # encoder: Linear(C, C) -> ReLU -> Linear(C, K)
    w1, b1 = init_linear(k1, IN_CHANNELS, IN_CHANNELS)
    w2, b2 = init_linear(k2, IN_CHANNELS, COMPRESSED_DIM)
    # decoder: Linear(K, C) -> ReLU -> Linear(C, C)
    w3, b3 = init_linear(k3, COMPRESSED_DIM, IN_CHANNELS)
    w4, b4 = init_linear(k4, IN_CHANNELS, IN_CHANNELS)
    params = (w1, b1, w2, b2, w3, b3, w4, b4)

    x = jax.random.normal(kx, (BATCH, IN_CHANNELS), jnp.float32)

    # channel noise ~ N(0, 1) / sqrt(2 * R * SNR); generated directly in
    # channels-first (K, B) layout so it is never transposed (AWGN is i.i.d.).
    noise_cf = jax.random.normal(kn, (COMPRESSED_DIM, BATCH), jnp.float32) \
        / ((2.0 * R * TRAIN_SNR) ** 0.5)

    out = rtn_forward(x, params, noise_cf)
    jax.block_until_ready(out)

    ref = rtn_reference(x, params, noise_cf)
    assert out.shape == (BATCH, IN_CHANNELS)
    assert jnp.allclose(out, ref, atol=2e-2, rtol=2e-2), "mismatch vs reference"
    print("KERNEL_OK")
</pallas_src>

<mosaic_0001>
module attributes {stable_mosaic.version = 11 : i64} {
  func.func @rtn_kernel(%arg0: i32, %arg1: memref<256x32xf32, #tpu.memory_space<vmem>>, %arg2: memref<32x32xf32, #tpu.memory_space<vmem>>, %arg3: memref<32x1xf32, #tpu.memory_space<vmem>>, %arg4: memref<8x32xf32, #tpu.memory_space<vmem>>, %arg5: memref<8x1xf32, #tpu.memory_space<vmem>>, %arg6: memref<32x8xf32, #tpu.memory_space<vmem>>, %arg7: memref<32x1xf32, #tpu.memory_space<vmem>>, %arg8: memref<32x32xf32, #tpu.memory_space<vmem>>, %arg9: memref<32x1xf32, #tpu.memory_space<vmem>>, %arg10: memref<8x256xf32, #tpu.memory_space<vmem>>, %arg11: memref<256x32xf32, #tpu.memory_space<vmem>>) attributes {dimension_semantics = [#tpu.dimension_semantics<parallel>], iteration_bounds = array<i64: 2>, scalar_prefetch = 0 : i64, scratch_operands = 0 : i64, tpu.core_type = #tpu.core_type<tc>, window_params = [{transform_indices = @transform_0, window_bounds = array<i64: 256, 32>}, {pipeline_mode = #tpu.pipeline_mode<synchronous>, transform_indices = @transform_1, window_bounds = array<i64: 32, 32>}, {pipeline_mode = #tpu.pipeline_mode<synchronous>, transform_indices = @transform_2, window_bounds = array<i64: 32, 1>}, {pipeline_mode = #tpu.pipeline_mode<synchronous>, transform_indices = @transform_3, window_bounds = array<i64: 8, 32>}, {pipeline_mode = #tpu.pipeline_mode<synchronous>, transform_indices = @transform_4, window_bounds = array<i64: 8, 1>}, {pipeline_mode = #tpu.pipeline_mode<synchronous>, transform_indices = @transform_5, window_bounds = array<i64: 32, 8>}, {pipeline_mode = #tpu.pipeline_mode<synchronous>, transform_indices = @transform_6, window_bounds = array<i64: 32, 1>}, {pipeline_mode = #tpu.pipeline_mode<synchronous>, transform_indices = @transform_7, window_bounds = array<i64: 32, 32>}, {pipeline_mode = #tpu.pipeline_mode<synchronous>, transform_indices = @transform_8, window_bounds = array<i64: 32, 1>}, {transform_indices = @transform_9, window_bounds = array<i64: 8, 256>}, {transform_indices = @transform_10, window_bounds = array<i64: 256, 32>}]} {
    %c0 = arith.constant 0 : index
    %c0_0 = arith.constant 0 : index
    %0 = vector.load %arg2[%c0, %c0_0] : memref<32x32xf32, #tpu.memory_space<vmem>>, vector<32x32xf32>
    %c0_1 = arith.constant 0 : index
    %c0_2 = arith.constant 0 : index
    %1 = vector.load %arg1[%c0_1, %c0_2] : memref<256x32xf32, #tpu.memory_space<vmem>>, vector<256x32xf32>
    %cst = arith.constant dense<0.000000e+00> : vector<32x256xf32>
    %2 = tpu.matmul %0, %1, %cst {dimension_numbers = #tpu.dot_dimension_numbers<[1], [1], [0], [0], [0, 0, 1, 0], [], []>} : vector<32x32xf32>, vector<256x32xf32>, vector<32x256xf32> -> vector<32x256xf32>
    %c0_3 = arith.constant 0 : index
    %c0_4 = arith.constant 0 : index
    %3 = vector.load %arg3[%c0_3, %c0_4] : memref<32x1xf32, #tpu.memory_space<vmem>>, vector<32x1xf32>
    %4 = vector.broadcast %3 : vector<32x1xf32> to vector<32x256xf32>
    %5 = arith.addf %2, %4 : vector<32x256xf32>
    %cst_5 = arith.constant 0.000000e+00 : f32
    %6 = vector.broadcast %cst_5 : f32 to vector<32x256xf32>
    %7 = arith.maximumf %5, %6 : vector<32x256xf32>
    %c0_6 = arith.constant 0 : index
    %c0_7 = arith.constant 0 : index
    %8 = vector.load %arg4[%c0_6, %c0_7] : memref<8x32xf32, #tpu.memory_space<vmem>>, vector<8x32xf32>
    %cst_8 = arith.constant dense<0.000000e+00> : vector<8x256xf32>
    %9 = tpu.matmul %8, %7, %cst_8 {dimension_numbers = #tpu.dot_dimension_numbers<[1], [0], [0], [1], [0, 0, 1, 1], [], []>} : vector<8x32xf32>, vector<32x256xf32>, vector<8x256xf32> -> vector<8x256xf32>
    %c0_9 = arith.constant 0 : index
    %c0_10 = arith.constant 0 : index
    %10 = vector.load %arg5[%c0_9, %c0_10] : memref<8x1xf32, #tpu.memory_space<vmem>>, vector<8x1xf32>
    %11 = vector.broadcast %10 : vector<8x1xf32> to vector<8x256xf32>
    %12 = arith.addf %9, %11 : vector<8x256xf32>
    %13 = arith.mulf %12, %12 : vector<8x256xf32>
    %cst_11 = arith.constant dense<0.000000e+00> : vector<256xf32>
    %14 = vector.multi_reduction <add>, %13, %cst_11 [0] : vector<8x256xf32> to vector<256xf32>
    %15 = vector.shape_cast %14 : vector<256xf32> to vector<1x256xf32>
    %cst_12 = arith.constant 9.99999996E-13 : f32
    %16 = vector.broadcast %cst_12 : f32 to vector<1x256xf32>
    %17 = arith.maximumf %15, %16 : vector<1x256xf32>
    %18 = math.rsqrt %17 : vector<1x256xf32>
    %cst_13 = arith.constant 5.65685415 : f32
    %19 = vector.broadcast %cst_13 : f32 to vector<1x256xf32>
    %20 = arith.mulf %19, %18 : vector<1x256xf32>
    %21 = vector.broadcast %20 : vector<1x256xf32> to vector<8x256xf32>
    %22 = arith.mulf %12, %21 : vector<8x256xf32>
    %c0_14 = arith.constant 0 : index
    %c0_15 = arith.constant 0 : index
    %23 = vector.load %arg10[%c0_14, %c0_15] : memref<8x256xf32, #tpu.memory_space<vmem>>, vector<8x256xf32>
    %24 = arith.addf %22, %23 : vector<8x256xf32>
    %c0_16 = arith.constant 0 : index
    %c0_17 = arith.constant 0 : index
    %25 = vector.load %arg6[%c0_16, %c0_17] : memref<32x8xf32, #tpu.memory_space<vmem>>, vector<32x8xf32>
    %cst_18 = arith.constant dense<0.000000e+00> : vector<32x256xf32>
    %26 = tpu.matmul %25, %24, %cst_18 {dimension_numbers = #tpu.dot_dimension_numbers<[1], [0], [0], [1], [0, 0, 1, 1], [], []>} : vector<32x8xf32>, vector<8x256xf32>, vector<32x256xf32> -> vector<32x256xf32>
    %c0_19 = arith.constant 0 : index
    %c0_20 = arith.constant 0 : index
    %27 = vector.load %arg7[%c0_19, %c0_20] : memref<32x1xf32, #tpu.memory_space<vmem>>, vector<32x1xf32>
    %28 = vector.broadcast %27 : vector<32x1xf32> to vector<32x256xf32>
    %29 = arith.addf %26, %28 : vector<32x256xf32>
    %cst_21 = arith.constant 0.000000e+00 : f32
    %30 = vector.broadcast %cst_21 : f32 to vector<32x256xf32>
    %31 = arith.maximumf %29, %30 : vector<32x256xf32>
    %c0_22 = arith.constant 0 : index
    %c0_23 = arith.constant 0 : index
    %32 = vector.load %arg8[%c0_22, %c0_23] : memref<32x32xf32, #tpu.memory_space<vmem>>, vector<32x32xf32>
    %cst_24 = arith.constant dense<0.000000e+00> : vector<32x256xf32>
    %33 = tpu.matmul %32, %31, %cst_24 {dimension_numbers = #tpu.dot_dimension_numbers<[1], [0], [0], [1], [0, 0, 1, 1], [], []>} : vector<32x32xf32>, vector<32x256xf32>, vector<32x256xf32> -> vector<32x256xf32>
    %c0_25 = arith.constant 0 : index
    %c0_26 = arith.constant 0 : index
    %34 = vector.load %arg9[%c0_25, %c0_26] : memref<32x1xf32, #tpu.memory_space<vmem>>, vector<32x1xf32>
    %35 = vector.broadcast %34 : vector<32x1xf32> to vector<32x256xf32>
    %36 = arith.addf %33, %35 : vector<32x256xf32>
    %37 = tpu.transpose %36, [1, 0] : vector<32x256xf32> -> vector<256x32xf32>
    %c0_27 = arith.constant 0 : index
    %c0_28 = arith.constant 0 : index
    %38 = vector.load %arg11[%c0_27, %c0_28] : memref<256x32xf32, #tpu.memory_space<vmem>>, vector<256x32xf32>
    tpu.vector_store %arg11[%c0_27, %c0_28], %37 {strides = array<i32>} : memref<256x32xf32, #tpu.memory_space<vmem>>, vector<256x32xf32>,
    return
  }
  func.func @transform_0(%arg0: i32) -> (i32, i32) {
    %c0_i32 = arith.constant 0 : i32
    %c0_i32_0 = arith.constant 0 : i32
    return %arg0, %c0_i32 : i32, i32
  }
  func.func @transform_1(%arg0: i32) -> (i32, i32) {
    %c0_i32 = arith.constant 0 : i32
    %c0_i32_0 = arith.constant 0 : i32
    %c0_i32_1 = arith.constant 0 : i32
    return %c0_i32, %c0_i32_0 : i32, i32
  }
  func.func @transform_2(%arg0: i32) -> (i32, i32) {
    %c0_i32 = arith.constant 0 : i32
    %c0_i32_0 = arith.constant 0 : i32
    %c0_i32_1 = arith.constant 0 : i32
    return %c0_i32, %c0_i32_0 : i32, i32
  }
  func.func @transform_3(%arg0: i32) -> (i32, i32) {
    %c0_i32 = arith.constant 0 : i32
    %c0_i32_0 = arith.constant 0 : i32
    %c0_i32_1 = arith.constant 0 : i32
    return %c0_i32, %c0_i32_0 : i32, i32
  }
  func.func @transform_4(%arg0: i32) -> (i32, i32) {
    %c0_i32 = arith.constant 0 : i32
    %c0_i32_0 = arith.constant 0 : i32
    %c0_i32_1 = arith.constant 0 : i32
    return %c0_i32, %c0_i32_0 : i32, i32
  }
  func.func @transform_5(%arg0: i32) -> (i32, i32) {
    %c0_i32 = arith.constant 0 : i32
    %c0_i32_0 = arith.constant 0 : i32
    %c0_i32_1 = arith.constant 0 : i32
    return %c0_i32, %c0_i32_0 : i32, i32
  }
  func.func @transform_6(%arg0: i32) -> (i32, i32) {
    %c0_i32 = arith.constant 0 : i32
    %c0_i32_0 = arith.constant 0 : i32
    %c0_i32_1 = arith.constant 0 : i32
    return %c0_i32, %c0_i32_0 : i32, i32
  }
  func.func @transform_7(%arg0: i32) -> (i32, i32) {
    %c0_i32 = arith.constant 0 : i32
    %c0_i32_0 = arith.constant 0 : i32
    %c0_i32_1 = arith.constant 0 : i32
    return %c0_i32, %c0_i32_0 : i32, i32
  }
  func.func @transform_8(%arg0: i32) -> (i32, i32) {
    %c0_i32 = arith.constant 0 : i32
    %c0_i32_0 = arith.constant 0 : i32
    %c0_i32_1 = arith.constant 0 : i32
    return %c0_i32, %c0_i32_0 : i32, i32
  }
  func.func @transform_9(%arg0: i32) -> (i32, i32) {
    %c0_i32 = arith.constant 0 : i32
    %c0_i32_0 = arith.constant 0 : i32
    return %c0_i32, %arg0 : i32, i32
  }
  func.func @transform_10(%arg0: i32) -> (i32, i32) {
    %c0_i32 = arith.constant 0 : i32
    %c0_i32_0 = arith.constant 0 : i32
    return %arg0, %c0_i32 : i32, i32
  }
}

</mosaic_0001>

<llo_original>
// kernel: tpu_custom_call.1
$region0: #{tpu_custom_call.1}
  #allocation0 [shape = 'u32[]', space=smem, size = 0x4, offset = 0x4, fixed_abs, tag = 'smem constant byte address 0x4 - core index']
  #allocation1 [shape = 'u32[72,128]{1,0:T(1,128)}', space=vmem, size = 0x9000, scoped, tag = 'internal scratch']
  %s0 = inlined_call_operand.vmem [shape: f32[512,32], index: 0, kind: input, shape index: {}]
  %s1 = inlined_call_operand.vmem [shape: f32[32,32], index: 1, kind: input, shape index: {}]
  %s2 = inlined_call_operand.vmem [shape: f32[32,1], index: 2, kind: input, shape index: {}]
  %s3 = inlined_call_operand.vmem [shape: f32[8,32], index: 3, kind: input, shape index: {}]
  %s4 = inlined_call_operand.vmem [shape: f32[8,1], index: 4, kind: input, shape index: {}]
  %s5 = inlined_call_operand.vmem [shape: f32[32,8], index: 5, kind: input, shape index: {}]
  %s6 = inlined_call_operand.vmem [shape: f32[32,1], index: 6, kind: input, shape index: {}]
  %s7 = inlined_call_operand.vmem [shape: f32[32,32], index: 7, kind: input, shape index: {}]
  %s8 = inlined_call_operand.vmem [shape: f32[32,1], index: 8, kind: input, shape index: {}]
  %s9 = inlined_call_operand.vmem [shape: f32[8,512], index: 9, kind: input, shape index: {}]
  %s10 = inlined_call_operand.vmem [shape: f32[512,32], index: 10, kind: output, shape index: {}]
  %s11 = sld [smem:[#allocation0]]
  $region73: #{tpu_custom_call.1} parent=0
    _
  %s13 = ssub.s32 1, %s11
  %s14 = scalar_select 0, %s13, %s11
  loop: start=0, step=1, limit=4
  $region2: #{tpu_custom_call.1} parent=0 // loop_pre_header
    _
  $region3: #{tpu_custom_call.1} parent=0 // loop_header
    %s16 = sphi 0, %s20
    %p17 = scmp.ge.s32.totalorder %s16, 4
    %s26 = sphi 0, %s28
    %s29 = sphi 0, %s26
    %s30 = sphi 0, %s29
    %s46 = sphi 0, %s30
    %s50 = sphi 0, %s50
    %s52 = sphi 0, %s50
    %s53 = sphi 0, %s52
    %s67 = sphi 0, %s53
    %s71 = sphi 0, %s71
    %s73 = sphi 0, %s71
    %s74 = sphi 0, %s73
    %s88 = sphi 0, %s74
    %s92 = sphi 0, %s92
    %s94 = sphi 0, %s92
    %s95 = sphi 0, %s94
    %s109 = sphi 0, %s95
    %s113 = sphi 0, %s113
    %s115 = sphi 0, %s113
    %s116 = sphi 0, %s115
    %s130 = sphi 0, %s116
    %s134 = sphi 0, %s134
    %s136 = sphi 0, %s134
    %s137 = sphi 0, %s136
    %s151 = sphi 0, %s137
    %s155 = sphi 0, %s155
    %s157 = sphi 0, %s155
    %s158 = sphi 0, %s157
    %s172 = sphi 0, %s158
    %s176 = sphi 0, %s176
    %s178 = sphi 0, %s176
    %s179 = sphi 0, %s178
    %s193 = sphi 0, %s179
    %s197 = sphi 0, %s197
    %s199 = sphi 0, %s197
    %s200 = sphi 0, %s199
    %s214 = sphi 0, %s200
    %s220 = sphi 0, %s222
    %s223 = sphi 0, %s220
    %s224 = sphi 0, %s223
    %s240 = sphi 0, %s224
    %s246 = sphi 0, %s248
    %s249 = sphi 0, %s246
    %s250 = sphi 0, %s249
    %s266 = sphi 0, %s250
  $region4: #{tpu_custom_call.1} parent=0 // loop_header_branch
    %19 = sbr.rel (%p17) target = $region8
  $region5: #{tpu_custom_call.1} parent=0 // loop_body
    %s21 = ssub.s32 %s16, 1
    %s22 = ssub.s32 %s16, 2
    %s23 = sadd.s32 %s16, 1
    %s24 = ssub.s32 %s16, %s23
    %p25 = scmp.eq.s32.totalorder %s24, 0
    %s27 = sadd.s32 %s26, 1
    %s28 = scalar_select %p25, %s26, %s27
    %p31 = pneg %p25
    %p32 = scmp.eq.s32.totalorder %s16, 1
    %p33 = por %p31, %p32
    %p34 = scmp.ne.s32.totalorder %s26, %s29
    %p35 = scmp.eq.s32.totalorder %s16, 0
    %p36 = por %p34, %p35
    %p37 = scmp.ne.s32.totalorder %s26, %s29
    %p38 = scmp.eq.s32.totalorder %s21, 1
    %p39 = por %p37, %p38
    %p40 = scmp.ne.s32.totalorder %s29, %s30
    %p41 = scmp.eq.s32.totalorder %s21, 0
    %p42 = por %p40, %p41
    %p43 = scmp.ne.s32.totalorder %s29, %s30
    %p44 = scmp.eq.s32.totalorder %s22, 1
    %p45 = por %p43, %p44
    %p47 = scmp.ne.s32.totalorder %s30, %s46
    %p48 = scmp.eq.s32.totalorder %s22, 0
    %p49 = por %p47, %p48
    %s51 = sadd.s32 %s50, 1
    %p54 = scmp.eq.s32.totalorder %s16, 1
    %p55 = scmp.ne.s32.totalorder %s50, %s52
    %p56 = scmp.eq.s32.totalorder %s16, 0
    %p57 = por %p55, %p56
    %p58 = scmp.ne.s32.totalorder %s50, %s52
    %p59 = scmp.eq.s32.totalorder %s21, 1
    %p60 = por %p58, %p59
    %p61 = scmp.ne.s32.totalorder %s52, %s53
    %p62 = scmp.eq.s32.totalorder %s21, 0
    %p63 = por %p61, %p62
    %p64 = scmp.ne.s32.totalorder %s52, %s53
    %p65 = scmp.eq.s32.totalorder %s22, 1
    %p66 = por %p64, %p65
    %p68 = scmp.ne.s32.totalorder %s53, %s67
    %p69 = scmp.eq.s32.totalorder %s22, 0
    %p70 = por %p68, %p69
    %s72 = sadd.s32 %s71, 1
    %p75 = scmp.eq.s32.totalorder %s16, 1
    %p76 = scmp.ne.s32.totalorder %s71, %s73
    %p77 = scmp.eq.s32.totalorder %s16, 0
    %p78 = por %p76, %p77
    %p79 = scmp.ne.s32.totalorder %s71, %s73
    %p80 = scmp.eq.s32.totalorder %s21, 1
    %p81 = por %p79, %p80
    %p82 = scmp.ne.s32.totalorder %s73, %s74
    %p83 = scmp.eq.s32.totalorder %s21, 0
    %p84 = por %p82, %p83
    %p85 = scmp.ne.s32.totalorder %s73, %s74
    %p86 = scmp.eq.s32.totalorder %s22, 1
    %p87 = por %p85, %p86
    %p89 = scmp.ne.s32.totalorder %s74, %s88
    %p90 = scmp.eq.s32.totalorder %s22, 0
    %p91 = por %p89, %p90
    %s93 = sadd.s32 %s92, 1
    %p96 = scmp.eq.s32.totalorder %s16, 1
    %p97 = scmp.ne.s32.totalorder %s92, %s94
    %p98 = scmp.eq.s32.totalorder %s16, 0
    %p99 = por %p97, %p98
    %p100 = scmp.ne.s32.totalorder %s92, %s94
    %p101 = scmp.eq.s32.totalorder %s21, 1
    %p102 = por %p100, %p101
    %p103 = scmp.ne.s32.totalorder %s94, %s95
    %p104 = scmp.eq.s32.totalorder %s21, 0
    %p105 = por %p103, %p104
    %p106 = scmp.ne.s32.totalorder %s94, %s95
    %p107 = scmp.eq.s32.totalorder %s22, 1
    %p108 = por %p106, %p107
    %p110 = scmp.ne.s32.totalorder %s95, %s109
    %p111 = scmp.eq.s32.totalorder %s22, 0
    %p112 = por %p110, %p111
    %s114 = sadd.s32 %s113, 1
    %p117 = scmp.eq.s32.totalorder %s16, 1
    %p118 = scmp.ne.s32.totalorder %s113, %s115
    %p119 = scmp.eq.s32.totalorder %s16, 0
    %p120 = por %p118, %p119
    %p121 = scmp.ne.s32.totalorder %s113, %s115
    %p122 = scmp.eq.s32.totalorder %s21, 1
    %p123 = por %p121, %p122
    %p124 = scmp.ne.s32.totalorder %s115, %s116
    %p125 = scmp.eq.s32.totalorder %s21, 0
    %p126 = por %p124, %p125
    %p127 = scmp.ne.s32.totalorder %s115, %s116
    %p128 = scmp.eq.s32.totalorder %s22, 1
    %p129 = por %p127, %p128
    %p131 = scmp.ne.s32.totalorder %s116, %s130
    %p132 = scmp.eq.s32.totalorder %s22, 0
    %p133 = por %p131, %p132
    %s135 = sadd.s32 %s134, 1
    %p138 = scmp.eq.s32.totalorder %s16, 1
    %p139 = scmp.ne.s32.totalorder %s134, %s136
    %p140 = scmp.eq.s32.totalorder %s16, 0
    %p141 = por %p139, %p140
    %p142 = scmp.ne.s32.totalorder %s134, %s136
    %p143 = scmp.eq.s32.totalorder %s21, 1
    %p144 = por %p142, %p143
    %p145 = scmp.ne.s32.totalorder %s136, %s137
    %p146 = scmp.eq.s32.totalorder %s21, 0
    %p147 = por %p145, %p146
    %p148 = scmp.ne.s32.totalorder %s136, %s137
    %p149 = scmp.eq.s32.totalorder %s22, 1
    %p150 = por %p148, %p149
    %p152 = scmp.ne.s32.totalorder %s137, %s151
    %p153 = scmp.eq.s32.totalorder %s22, 0
    %p154 = por %p152, %p153
    %s156 = sadd.s32 %s155, 1
    %p159 = scmp.eq.s32.totalorder %s16, 1
    %p160 = scmp.ne.s32.totalorder %s155, %s157
    %p161 = scmp.eq.s32.totalorder %s16, 0
    %p162 = por %p160, %p161
    %p163 = scmp.ne.s32.totalorder %s155, %s157
    %p164 = scmp.eq.s32.totalorder %s21, 1
    %p165 = por %p163, %p164
    %p166 = scmp.ne.s32.totalorder %s157, %s158
    %p167 = scmp.eq.s32.totalorder %s21, 0
    %p168 = por %p166, %p167
    %p169 = scmp.ne.s32.totalorder %s157, %s158
    %p170 = scmp.eq.s32.totalorder %s22, 1
    %p171 = por %p169, %p170
    %p173 = scmp.ne.s32.totalorder %s158, %s172
    %p174 = scmp.eq.s32.totalorder %s22, 0
    %p175 = por %p173, %p174
    %s177 = sadd.s32 %s176, 1
    %p180 = scmp.eq.s32.totalorder %s16, 1
    %p181 = scmp.ne.s32.totalorder %s176, %s178
    %p182 = scmp.eq.s32.totalorder %s16, 0
    %p183 = por %p181, %p182
    %p184 = scmp.ne.s32.totalorder %s176, %s178
    %p185 = scmp.eq.s32.totalorder %s21, 1
    %p186 = por %p184, %p185
    %p187 = scmp.ne.s32.totalorder %s178, %s179
    %p188 = scmp.eq.s32.totalorder %s21, 0
    %p189 = por %p187, %p188
    %p190 = scmp.ne.s32.totalorder %s178, %s179
    %p191 = scmp.eq.s32.totalorder %s22, 1
    %p192 = por %p190, %p191
    %p194 = scmp.ne.s32.totalorder %s179, %s193
    %p195 = scmp.eq.s32.totalorder %s22, 0
    %p196 = por %p194, %p195
    %s198 = sadd.s32 %s197, 1
    %p201 = scmp.eq.s32.totalorder %s16, 1
    %p202 = scmp.ne.s32.totalorder %s197, %s199
    %p203 = scmp.eq.s32.totalorder %s16, 0
    %p204 = por %p202, %p203
    %p205 = scmp.ne.s32.totalorder %s197, %s199
    %p206 = scmp.eq.s32.totalorder %s21, 1
    %p207 = por %p205, %p206
    %p208 = scmp.ne.s32.totalorder %s199, %s200
    %p209 = scmp.eq.s32.totalorder %s21, 0
    %p210 = por %p208, %p209
    %p211 = scmp.ne.s32.totalorder %s199, %s200
    %p212 = scmp.eq.s32.totalorder %s22, 1
    %p213 = por %p211, %p212
    %p215 = scmp.ne.s32.totalorder %s200, %s214
    %p216 = scmp.eq.s32.totalorder %s22, 0
    %p217 = por %p215, %p216
    %s218 = ssub.s32 %s16, %s23
    %p219 = scmp.eq.s32.totalorder %s218, 0
    %s221 = sadd.s32 %s220, 1
    %s222 = scalar_select %p219, %s220, %s221
    %p225 = pneg %p219
    %p226 = scmp.eq.s32.totalorder %s16, 1
    %p227 = por %p225, %p226
    %p228 = scmp.ne.s32.totalorder %s220, %s223
    %p229 = scmp.eq.s32.totalorder %s16, 0
    %p230 = por %p228, %p229
    %p231 = scmp.ne.s32.totalorder %s220, %s223
    %p232 = scmp.eq.s32.totalorder %s21, 1
    %p233 = por %p231, %p232
    %p234 = scmp.ne.s32.totalorder %s223, %s224
    %p235 = scmp.eq.s32.totalorder %s21, 0
    %p236 = por %p234, %p235
    %p237 = scmp.ne.s32.totalorder %s223, %s224
    %p238 = scmp.eq.s32.totalorder %s22, 1
    %p239 = por %p237, %p238
    %p241 = scmp.ne.s32.totalorder %s224, %s240
    %p242 = scmp.eq.s32.totalorder %s22, 0
    %p243 = por %p241, %p242
    %s244 = ssub.s32 %s16, %s23
    %p245 = scmp.eq.s32.totalorder %s244, 0
    %s247 = sadd.s32 %s246, 1
    %s248 = scalar_select %p245, %s246, %s247
    %p251 = pneg %p245
    %p252 = scmp.eq.s32.totalorder %s16, 1
    %p253 = por %p251, %p252
    %p254 = scmp.ne.s32.totalorder %s246, %s249
    %p255 = scmp.eq.s32.totalorder %s16, 0
    %p256 = por %p254, %p255
    %p257 = scmp.ne.s32.totalorder %s246, %s249
    %p258 = scmp.eq.s32.totalorder %s21, 1
    %p259 = por %p257, %p258
    %p260 = scmp.ne.s32.totalorder %s249, %s250
    %p261 = scmp.eq.s32.totalorder %s21, 0
    %p262 = por %p260, %p261
    %p263 = scmp.ne.s32.totalorder %s249, %s250
    %p264 = scmp.eq.s32.totalorder %s22, 1
    %p265 = por %p263, %p264
    %p267 = scmp.ne.s32.totalorder %s250, %s266
    %p268 = scmp.eq.s32.totalorder %s22, 0
    %p269 = por %p267, %p268
    %p270 = scmp.le.s32.totalorder 1, %s16
    %p271 = scmp.lt.s32.totalorder %s16, 3
    %p272 = pnand %p270, %p271
    %p273 = pneg %p272
    // Predicated region
    $region9: #{tpu_custom_call.1} parent=5 // pred_check
      _
    $region10: #{tpu_custom_call.1} parent=5 // pred_check_branch
      %275 = sbr.rel (%p272) target = $region12
    $region11: #{tpu_custom_call.1} parent=5 // pred_region
      %s276 = ssub.s32 %s16, 1
      // Predicated region
      $region13: #{tpu_custom_call.1} parent=11 // pred_check
        %p277 = pneg %p63
      $region14: #{tpu_custom_call.1} parent=11 // pred_check_branch
        %279 = sbr.rel (%p277) target = $region16
      $region15: #{tpu_custom_call.1} parent=11 // pred_region
        _
      $region16: #{tpu_custom_call.1} parent=11 // pred_fallthru
        _
      // Predicated region
      $region17: #{tpu_custom_call.1} parent=11 // pred_check
        %p280 = pneg %p84
      $region18: #{tpu_custom_call.1} parent=11 // pred_check_branch
        %282 = sbr.rel (%p280) target = $region20
      $region19: #{tpu_custom_call.1} parent=11 // pred_region
        _
      $region20: #{tpu_custom_call.1} parent=11 // pred_fallthru
        _
      // Predicated region
      $region21: #{tpu_custom_call.1} parent=11 // pred_check
        %p283 = pneg %p105
      $region22: #{tpu_custom_call.1} parent=11 // pred_check_branch
        %285 = sbr.rel (%p283) target = $region24
      $region23: #{tpu_custom_call.1} parent=11 // pred_region
        _
      $region24: #{tpu_custom_call.1} parent=11 // pred_fallthru
        _
      // Predicated region
      $region25: #{tpu_custom_call.1} parent=11 // pred_check
        %p286 = pneg %p126
      $region26: #{tpu_custom_call.1} parent=11 // pred_check_branch
        %288 = sbr.rel (%p286) target = $region28
      $region27: #{tpu_custom_call.1} parent=11 // pred_region
        _
      $region28: #{tpu_custom_call.1} parent=11 // pred_fallthru
        _
      // Predicated region
      $region29: #{tpu_custom_call.1} parent=11 // pred_check
        %p289 = pneg %p147
      $region30: #{tpu_custom_call.1} parent=11 // pred_check_branch
        %291 = sbr.rel (%p289) target = $region32
      $region31: #{tpu_custom_call.1} parent=11 // pred_region
        _
      $region32: #{tpu_custom_call.1} parent=11 // pred_fallthru
        _
      // Predicated region
      $region33: #{tpu_custom_call.1} parent=11 // pred_check
        %p292 = pneg %p168
      $region34: #{tpu_custom_call.1} parent=11 // pred_check_branch
        %294 = sbr.rel (%p292) target = $region36
      $region35: #{tpu_custom_call.1} parent=11 // pred_region
        _
      $region36: #{tpu_custom_call.1} parent=11 // pred_fallthru
        _
      // Predicated region
      $region37: #{tpu_custom_call.1} parent=11 // pred_check
        %p295 = pneg %p189
      $region38: #{tpu_custom_call.1} parent=11 // pred_check_branch
        %297 = sbr.rel (%p295) target = $region40
      $region39: #{tpu_custom_call.1} parent=11 // pred_region
        _
      $region40: #{tpu_custom_call.1} parent=11 // pred_fallthru
        _
      // Predicated region
      $region41: #{tpu_custom_call.1} parent=11 // pred_check
        %p298 = pneg %p210
      $region42: #{tpu_custom_call.1} parent=11 // pred_check_branch
        %300 = sbr.rel (%p298) target = $region44
      $region43: #{tpu_custom_call.1} parent=11 // pred_region
        _
      $region44: #{tpu_custom_call.1} parent=11 // pred_fallthru
        _
    $region12: #{tpu_custom_call.1} parent=5 // pred_fallthru
      _
    %p301 = scmp.lt.s32.totalorder %s16, 2
    // Predicated region
    $region45: #{tpu_custom_call.1} parent=5 // pred_check
      %p302 = pneg %p301
    $region46: #{tpu_custom_call.1} parent=5 // pred_check_branch
      %304 = sbr.rel (%p302) target = $region48
    $region47: #{tpu_custom_call.1} parent=5 // pred_region
      // Predicated region
      $region49: #{tpu_custom_call.1} parent=47 // pred_check
        %p305 = pneg %p36
      $region50: #{tpu_custom_call.1} parent=47 // pred_check_branch
        %307 = sbr.rel (%p305) target = $region52
      $region51: #{tpu_custom_call.1} parent=47 // pred_region
        %s308 = smul.u32 32, %s16
        %p309 = scmp.lt.s32.totalorder %s308, 63
        %s310 = scalar_select %p309, %s308, 63
        %s311 = smul.addr %s310, 8
        %s312 = scalar_lea.vmem %s0, %s311
        %s313 = smul.u32 32, %s16
      $region52: #{tpu_custom_call.1} parent=47 // pred_fallthru
        _
      // Predicated region
      $region53: #{tpu_custom_call.1} parent=47 // pred_check
        %p314 = pneg %p230
      $region54: #{tpu_custom_call.1} parent=47 // pred_check_branch
        %316 = sbr.rel (%p314) target = $region56
      $region55: #{tpu_custom_call.1} parent=47 // pred_region
        %s317 = smul.u32 2, %s16
        %p318 = scmp.lt.s32.totalorder %s317, 3
        %s319 = scalar_select %p318, %s317, 3
        %s320 = smul.addr %s319, 8
        %s321 = scalar_lea.vmem %s9, %s320
        %s322 = smul.u32 2, %s16
      $region56: #{tpu_custom_call.1} parent=47 // pred_fallthru
        _
    $region48: #{tpu_custom_call.1} parent=5 // pred_fallthru
      _
    %p323 = scmp.le.s32.totalorder 1, %s16
    %p324 = scmp.lt.s32.totalorder %s16, 3
    %p325 = pnand %p323, %p324
    %p326 = pneg %p325
    // Predicated region
    $region57: #{tpu_custom_call.1} parent=5 // pred_check
      _
    $region58: #{tpu_custom_call.1} parent=5 // pred_check_branch
      %328 = sbr.rel (%p325) target = $region60
    $region59: #{tpu_custom_call.1} parent=5 // pred_region
      %s329 = ssub.s32 %s16, 1
      %s330 = smul.u32 32, %s21
      %p331 = scmp.lt.s32.totalorder %s330, 63
      %s332 = scalar_select %p331, %s330, 63
      %s333 = smul.addr %s332, 8
      %s334 = scalar_lea.vmem %s0, %s333
      %p335 = pneg %p42
      %p336 = pneg %p39
      %p337 = pneg %p63
      %p338 = pneg %p60
      %p339 = pneg %p84
      %p340 = pneg %p81
      %p341 = pneg %p105
      %p342 = pneg %p102
      %p343 = pneg %p126
      %p344 = pneg %p123
      %p345 = pneg %p147
      %p346 = pneg %p144
      %p347 = pneg %p168
      %p348 = pneg %p165
      %p349 = pneg %p189
      %p350 = pneg %p186
      %p351 = pneg %p210
      %p352 = pneg %p207
      %s353 = smul.u32 2, %s21
      %p354 = scmp.lt.s32.totalorder %s353, 3
      %s355 = scalar_select %p354, %s353, 3
      %s356 = smul.addr %s355, 8
      %s357 = scalar_lea.vmem %s9, %s356
      %p358 = pneg %p236
      %p359 = pneg %p233
      %p360 = pneg %p262
      %p361 = pneg %p259
      %s362 = smul.u32 32, %s21
      %p363 = scmp.lt.s32.totalorder %s362, 63
      %s364 = scalar_select %p363, %s362, 63
      %s365 = smul.addr %s364, 8
      %s366 = scalar_lea.vmem %s10, %s365
      %s367 = smul.u32 32, %s21
      %p368 = scmp.lt.s32.totalorder %s367, 63
      %s369 = scalar_select %p368, %s367, 63
      %s370 = smul.addr %s369, 8
      %s371 = scalar_lea.vmem %s0, %s370
      %s372 = smul.u32 32, %s21
      %s373 = smul.u32 2, %s21
      %p374 = scmp.lt.s32.totalorder %s373, 3
      %s375 = scalar_select %p374, %s373, 3
      %s376 = smul.addr %s375, 8
      %s377 = scalar_lea.vmem %s9, %s376
      %s378 = smul.u32 2, %s21
      %s379 = smul.u32 32, %s21
      %p380 = scmp.lt.s32.totalorder %s379, 63
      %s381 = scalar_select %p380, %s379, 63
      %s382 = smul.addr %s381, 8
      %s383 = scalar_lea.vmem %s10, %s382
      %s384 = smul.u32 32, %s21
      %v385 = vld [vmem:[%s1] sm:$0xff]
      %v386 = vld [vmem:[%s1 + $0x8] sm:$0xff]
      %v387 = vld [vmem:[%s1 + $0x10] sm:$0xff]
      %v388 = vld [vmem:[%s1 + $0x18] sm:$0xff]
      %v389 = vld [vmem:[%s371] sm:$0xff]
      %v390 = vld [vmem:[%s371 + $0x8] sm:$0xff]
      %v391 = vld [vmem:[%s371 + $0x10] sm:$0xff]
      %v392 = vld [vmem:[%s371 + $0x18] sm:$0xff]
      %v393 = vld [vmem:[%s371 + $0x20] sm:$0xff]
      %v394 = vld [vmem:[%s371 + $0x28] sm:$0xff]
      %v395 = vld [vmem:[%s371 + $0x30] sm:$0xff]
      %v396 = vld [vmem:[%s371 + $0x38] sm:$0xff]
      %v397 = vld [vmem:[%s371 + $0x40] sm:$0xff]
      %v398 = vld [vmem:[%s371 + $0x48] sm:$0xff]
      %v399 = vld [vmem:[%s371 + $0x50] sm:$0xff]
      %v400 = vld [vmem:[%s371 + $0x58] sm:$0xff]
      %v401 = vld [vmem:[%s371 + $0x60] sm:$0xff]
      %v402 = vld [vmem:[%s371 + $0x68] sm:$0xff]
      %v403 = vld [vmem:[%s371 + $0x70] sm:$0xff]
      %v404 = vld [vmem:[%s371 + $0x78] sm:$0xff]
      %v405 = vld [vmem:[%s371 + $0x80] sm:$0xff]
      %v406 = vld [vmem:[%s371 + $0x88] sm:$0xff]
      %v407 = vld [vmem:[%s371 + $0x90] sm:$0xff]
      %v408 = vld [vmem:[%s371 + $0x98] sm:$0xff]
      %v409 = vld [vmem:[%s371 + $0xa0] sm:$0xff]
      %v410 = vld [vmem:[%s371 + $0xa8] sm:$0xff]
      %v411 = vld [vmem:[%s371 + $0xb0] sm:$0xff]
      %v412 = vld [vmem:[%s371 + $0xb8] sm:$0xff]
      %v413 = vld [vmem:[%s371 + $0xc0] sm:$0xff]
      %v414 = vld [vmem:[%s371 + $0xc8] sm:$0xff]
      %v415 = vld [vmem:[%s371 + $0xd0] sm:$0xff]
      %v416 = vld [vmem:[%s371 + $0xd8] sm:$0xff]
      %v417 = vld [vmem:[%s371 + $0xe0] sm:$0xff]
      %v418 = vld [vmem:[%s371 + $0xe8] sm:$0xff]
      %v419 = vld [vmem:[%s371 + $0xf0] sm:$0xff]
      %v420 = vld [vmem:[%s371 + $0xf8] sm:$0xff]
      %v421 = vld [vmem:[%s2] sm:$0xff]
      %v422 = vld [vmem:[%s2 + $0x8] sm:$0xff]
      %v423 = vld [vmem:[%s2 + $0x10] sm:$0xff]
      %v424 = vld [vmem:[%s2 + $0x18] sm:$0xff]
      %426 = vset.pattern.permute.xlu0 0
      %427 = vperm.xlu0 %426, %v421
      %v428 = vpop.permute.xlu0 %427
      %431 = vset.pattern.permute.xlu0 0
      %432 = vperm.xlu0 %431, %v422
      %v433 = vpop.permute.xlu0 %432
      %436 = vset.pattern.permute.xlu0 0
      %437 = vperm.xlu0 %436, %v423
      %v438 = vpop.permute.xlu0 %437
      %441 = vset.pattern.permute.xlu0 0
      %442 = vperm.xlu0 %441, %v424
      %v443 = vpop.permute.xlu0 %442
      %vm445 = vcmask 261120
      %v447 = vsel %vm445, %v385, 0
      %v450 = vsel %vm445, %v386, 0
      %v453 = vsel %vm445, %v387, 0
      %v456 = vsel %vm445, %v388, 0
      %v459 = vsel %vm445, %v389, 0
      %v462 = vsel %vm445, %v390, 0
      %v465 = vsel %vm445, %v391, 0
      %v468 = vsel %vm445, %v392, 0
      %v471 = vsel %vm445, %v393, 0
      %v474 = vsel %vm445, %v394, 0
      %v477 = vsel %vm445, %v395, 0
      %v480 = vsel %vm445, %v396, 0
      %v483 = vsel %vm445, %v397, 0
      %v486 = vsel %vm445, %v398, 0
      %v489 = vsel %vm445, %v399, 0
      %v492 = vsel %vm445, %v400, 0
      %v495 = vsel %vm445, %v401, 0
      %v498 = vsel %vm445, %v402, 0
      %v501 = vsel %vm445, %v403, 0
      %v504 = vsel %vm445, %v404, 0
      %v507 = vsel %vm445, %v405, 0
      %v510 = vsel %vm445, %v406, 0
      %v513 = vsel %vm445, %v407, 0
      %v516 = vsel %vm445, %v408, 0
      %v519 = vsel %vm445, %v409, 0
      %v522 = vsel %vm445, %v410, 0
      %v525 = vsel %vm445, %v411, 0
      %v528 = vsel %vm445, %v412, 0
      %v531 = vsel %vm445, %v413, 0
      %v534 = vsel %vm445, %v414, 0
      %v537 = vsel %vm445, %v415, 0
      %v540 = vsel %vm445, %v416, 0
      %v543 = vsel %vm445, %v417, 0
      %v546 = vsel %vm445, %v418, 0
      %v549 = vsel %vm445, %v419, 0
      %v552 = vsel %vm445, %v420, 0
      %554 = vmatpush.xpose.msra.mxu0 %v504
      %555 = vmatpush.xpose.msra.mxu0 %v501
      %556 = vmatpush.xpose.msra.mxu0 %v498
      %557 = vmatpush.xpose.msra.mxu0 %v495
      %558 = vmatpush.xpose.msra.mxu0 %v492
      %559 = vmatpush.xpose.msra.mxu0 %v489
      %560 = vmatpush.xpose.msra.mxu0 %v486
      %561 = vmatpush.xpose.msra.mxu0 %v483
      %562 = vmatpush.xpose.msra.mxu0 %v480
      %563 = vmatpush.xpose.msra.mxu0 %v477
      %564 = vmatpush.xpose.msra.mxu0 %v474
      %565 = vmatpush.xpose.msra.mxu0 %v471
      %566 = vmatpush.xpose.msra.mxu0 %v468
      %567 = vmatpush.xpose.msra.mxu0 %v465
      %568 = vmatpush.xpose.msra.mxu0 %v462
      %569 = vmatpush.xpose.msra.mxu0 %v459
      %570 = vmatmul.f32.gmra.mxu0 %v447
      %v571 = vpop.f32.mrf.mxu0
      %v572 = vadd.f32 %v428, %v571
      %573 = vmatmul.f32.gmra.mxu0 %v450
      %v574 = vpop.f32.mrf.mxu0
      %v575 = vadd.f32 %v433, %v574
      %576 = vmatmul.f32.gmra.mxu0 %v453
      %v577 = vpop.f32.mrf.mxu0
      %v578 = vadd.f32 %v438, %v577
      %579 = vmatmul.f32.gmra.mxu0 %v456
      %v580 = vpop.f32.mrf.mxu0
      %v581 = vadd.f32 %v443, %v580
      %582 = vdwg.mxu0
      %583 = vmatpush.xpose.msra.mxu0 %v552
      %584 = vmatpush.xpose.msra.mxu0 %v549
      %585 = vmatpush.xpose.msra.mxu0 %v546
      %586 = vmatpush.xpose.msra.mxu0 %v543
      %587 = vmatpush.xpose.msra.mxu0 %v540
      %588 = vmatpush.xpose.msra.mxu0 %v537
      %589 = vmatpush.xpose.msra.mxu0 %v534
      %590 = vmatpush.xpose.msra.mxu0 %v531
      %591 = vmatpush.xpose.msra.mxu0 %v528
      %592 = vmatpush.xpose.msra.mxu0 %v525
      %593 = vmatpush.xpose.msra.mxu0 %v522
      %594 = vmatpush.xpose.msra.mxu0 %v519
      %595 = vmatpush.xpose.msra.mxu0 %v516
      %596 = vmatpush.xpose.msra.mxu0 %v513
      %597 = vmatpush.xpose.msra.mxu0 %v510
      %598 = vmatpush.xpose.msra.mxu0 %v507
      %599 = vmatmul.f32.gmra.mxu0 %v447
      %v600 = vpop.f32.mrf.mxu0
      %v601 = vadd.f32 %v428, %v600
      %602 = vmatmul.f32.gmra.mxu0 %v450
      %v603 = vpop.f32.mrf.mxu0
      %v604 = vadd.f32 %v433, %v603
      %605 = vmatmul.f32.gmra.mxu0 %v453
      %v606 = vpop.f32.mrf.mxu0
      %v607 = vadd.f32 %v438, %v606
      %608 = vmatmul.f32.gmra.mxu0 %v456
      %v609 = vpop.f32.mrf.mxu0
      %v610 = vadd.f32 %v443, %v609
      %611 = vdwg.mxu0
      %v612 = vmax.f32 %v572, 0.0
      %v613 = vmax.f32 %v601, 0.0
      %v614 = vmax.f32 %v575, 0.0
      %v615 = vmax.f32 %v604, 0.0
      %v616 = vmax.f32 %v578, 0.0
      %v617 = vmax.f32 %v607, 0.0
      %v618 = vmax.f32 %v581, 0.0
      %v619 = vmax.f32 %v610, 0.0
      %v620 = vld [vmem:[%s3] sm:$0xff]
      %v621 = vld [vmem:[%s4] sm:$0xff]
      %623 = vset.pattern.permute.xlu0 0
      %624 = vperm.xlu0 %623, %v621
      %v625 = vpop.permute.xlu0 %624
      %v628 = vsel %vm445, %v620, 0
      %630 = vmatpush.msra.mxu0 0.0
      %631 = vmatpush.msra.mxu0 0.0
      %632 = vmatpush.msra.mxu0 0.0
      %633 = vmatpush.msra.mxu0 0.0
      %634 = vmatpush.msra.mxu0 0.0
      %635 = vmatpush.msra.mxu0 0.0
      %636 = vmatpush.msra.mxu0 0.0
      %637 = vmatpush.msra.mxu0 0.0
      %638 = vmatpush.msra.mxu0 0.0
      %639 = vmatpush.msra.mxu0 0.0
      %640 = vmatpush.msra.mxu0 0.0
      %641 = vmatpush.msra.mxu0 0.0
      %642 = vmatpush.msra.mxu0 %v618
      %643 = vmatpush.msra.mxu0 %v616
      %644 = vmatpush.msra.mxu0 %v614
      %645 = vmatpush.msra.mxu0 %v612
      %646 = vmatmul.f32.gmra.mxu0 %v628
      %v647 = vpop.f32.mrf.mxu0
      %v648 = vadd.f32 %v625, %v647
      %649 = vdwg.mxu0
      %650 = vmatpush.msra.mxu0 0.0
      %651 = vmatpush.msra.mxu0 0.0
      %652 = vmatpush.msra.mxu0 0.0
      %653 = vmatpush.msra.mxu0 0.0
      %654 = vmatpush.msra.mxu0 0.0
      %655 = vmatpush.msra.mxu0 0.0
      %656 = vmatpush.msra.mxu0 0.0
      %657 = vmatpush.msra.mxu0 0.0
      %658 = vmatpush.msra.mxu0 0.0
      %659 = vmatpush.msra.mxu0 0.0
      %660 = vmatpush.msra.mxu0 0.0
      %661 = vmatpush.msra.mxu0 0.0
      %662 = vmatpush.msra.mxu0 %v619
      %663 = vmatpush.msra.mxu0 %v617
      %664 = vmatpush.msra.mxu0 %v615
      %665 = vmatpush.msra.mxu0 %v613
      %666 = vmatmul.f32.gmra.mxu0 %v628
      %v667 = vpop.f32.mrf.mxu0
      %v668 = vadd.f32 %v625, %v667
      %669 = vdwg.mxu0
      %v670 = vmul.f32 %v648, %v648
      %v671 = vmul.f32 %v668, %v668
      %v672 = vrot.slane %v670, 4
      %v673 = vadd.f32 %v670, %v672
      %v674 = vrot.slane %v673, 2
      %v675 = vadd.f32 %v673, %v674
      %v676 = vrot.slane %v675, 1
      %v677 = vadd.f32 %v675, %v676
      %v678 = vrot.slane %v671, 4
      %v679 = vadd.f32 %v671, %v678
      %v680 = vrot.slane %v679, 2
      %v681 = vadd.f32 %v679, %v680
      %v682 = vrot.slane %v681, 1
      %v683 = vadd.f32 %v681, %v682
      %v684 = vmax.f32 %v677, 1e-12
      %v685 = vmax.f32 %v683, 1e-12
      %v686 = vrsqrt.pop %v684
      %v687 = vmul.f32 %v686, %v684
      %v688 = vmul.f32 %v687, %v686
      %v689 = vmul.f32 0.5, %v688
      %v690 = vsub.f32 1.5, %v689
      %v691 = vmul.f32 %v686, %v690
      %vm692 = vweird.f32 %v684
      %vm693 = vweird.f32 %v686
      %vm694 = vmor %vm692, %vm693
      %v695 = vsel %vm694, %v686, %v691
      %v696 = vrsqrt.pop %v685
      %v697 = vmul.f32 %v696, %v685
      %v698 = vmul.f32 %v697, %v696
      %v699 = vmul.f32 0.5, %v698
      %v700 = vsub.f32 1.5, %v699
      %v701 = vmul.f32 %v696, %v700
      %vm702 = vweird.f32 %v685
      %vm703 = vweird.f32 %v696
      %vm704 = vmor %vm702, %vm703
      %v705 = vsel %vm704, %v696, %v701
      %v706 = vmul.f32 %v695, 5.656854
      %v707 = vmul.f32 %v705, 5.656854
      %v708 = vmul.f32 %v648, %v706
      %v709 = vmul.f32 %v668, %v707
      %v710 = vld [vmem:[%s377] sm:$0xff]
      %v711 = vld [vmem:[%s377 + $0x8] sm:$0xff]
      %v712 = vadd.f32 %v708, %v710
      %v713 = vadd.f32 %v709, %v711
      %v714 = vld [vmem:[%s5] sm:$0xff]
      %v715 = vld [vmem:[%s5 + $0x8] sm:$0xff]
      %v716 = vld [vmem:[%s5 + $0x10] sm:$0xff]
      %v717 = vld [vmem:[%s5 + $0x18] sm:$0xff]
      %v718 = vld [vmem:[%s6] sm:$0xff]
      %v719 = vld [vmem:[%s6 + $0x8] sm:$0xff]
      %v720 = vld [vmem:[%s6 + $0x10] sm:$0xff]
      %v721 = vld [vmem:[%s6 + $0x18] sm:$0xff]
      %723 = vset.pattern.permute.xlu0 0
      %724 = vperm.xlu0 %723, %v718
      %v725 = vpop.permute.xlu0 %724
      %728 = vset.pattern.permute.xlu0 0
      %729 = vperm.xlu0 %728, %v719
      %v730 = vpop.permute.xlu0 %729
      %733 = vset.pattern.permute.xlu0 0
      %734 = vperm.xlu0 %733, %v720
      %v735 = vpop.permute.xlu0 %734
      %738 = vset.pattern.permute.xlu0 0
      %739 = vperm.xlu0 %738, %v721
      %v740 = vpop.permute.xlu0 %739
      %vm742 = vcmask 64512
      %v744 = vsel %vm742, %v714, 0
      %v747 = vsel %vm742, %v715, 0
      %v750 = vsel %vm742, %v716, 0
      %v753 = vsel %vm742, %v717, 0
      %755 = vmatpush.msra.mxu0 0.0
      %756 = vmatpush.msra.mxu0 0.0
      %757 = vmatpush.msra.mxu0 0.0
      %758 = vmatpush.msra.mxu0 0.0
      %759 = vmatpush.msra.mxu0 0.0
      %760 = vmatpush.msra.mxu0 0.0
      %761 = vmatpush.msra.mxu0 0.0
      %762 = vmatpush.msra.mxu0 0.0
      %763 = vmatpush.msra.mxu0 0.0
      %764 = vmatpush.msra.mxu0 0.0
      %765 = vmatpush.msra.mxu0 0.0
      %766 = vmatpush.msra.mxu0 0.0
      %767 = vmatpush.msra.mxu0 0.0
      %768 = vmatpush.msra.mxu0 0.0
      %769 = vmatpush.msra.mxu0 0.0
      %770 = vmatpush.msra.mxu0 %v712
      %771 = vmatmul.f32.gmra.mxu0 %v744
      %v772 = vpop.f32.mrf.mxu0
      %v773 = vadd.f32 %v725, %v772
      %774 = vmatmul.f32.gmra.mxu0 %v747
      %v775 = vpop.f32.mrf.mxu0
      %v776 = vadd.f32 %v730, %v775
      %777 = vmatmul.f32.gmra.mxu0 %v750
      %v778 = vpop.f32.mrf.mxu0
      %v779 = vadd.f32 %v735, %v778
      %780 = vmatmul.f32.gmra.mxu0 %v753
      %v781 = vpop.f32.mrf.mxu0
      %v782 = vadd.f32 %v740, %v781
      %783 = vdwg.mxu0
      %784 = vmatpush.msra.mxu0 0.0
      %785 = vmatpush.msra.mxu0 0.0
      %786 = vmatpush.msra.mxu0 0.0
      %787 = vmatpush.msra.mxu0 0.0
      %788 = vmatpush.msra.mxu0 0.0
      %789 = vmatpush.msra.mxu0 0.0
      %790 = vmatpush.msra.mxu0 0.0
      %791 = vmatpush.msra.mxu0 0.0
      %792 = vmatpush.msra.mxu0 0.0
      %793 = vmatpush.msra.mxu0 0.0
      %794 = vmatpush.msra.mxu0 0.0
      %795 = vmatpush.msra.mxu0 0.0
      %796 = vmatpush.msra.mxu0 0.0
      %797 = vmatpush.msra.mxu0 0.0
      %798 = vmatpush.msra.mxu0 0.0
      %799 = vmatpush.msra.mxu0 %v713
      %800 = vmatmul.f32.gmra.mxu0 %v744
      %v801 = vpop.f32.mrf.mxu0
      %v802 = vadd.f32 %v725, %v801
      %803 = vmatmul.f32.gmra.mxu0 %v747
      %v804 = vpop.f32.mrf.mxu0
      %v805 = vadd.f32 %v730, %v804
      %806 = vmatmul.f32.gmra.mxu0 %v750
      %v807 = vpop.f32.mrf.mxu0
      %v808 = vadd.f32 %v735, %v807
      %809 = vmatmul.f32.gmra.mxu0 %v753
      %v810 = vpop.f32.mrf.mxu0
      %v811 = vadd.f32 %v740, %v810
      %812 = vdwg.mxu0
      %v813 = vmax.f32 %v773, 0.0
      %v814 = vmax.f32 %v802, 0.0
      %v815 = vmax.f32 %v776, 0.0
      %v816 = vmax.f32 %v805, 0.0
      %v817 = vmax.f32 %v779, 0.0
      %v818 = vmax.f32 %v808, 0.0
      %v819 = vmax.f32 %v782, 0.0
      %v820 = vmax.f32 %v811, 0.0
      %v821 = vld [vmem:[%s7] sm:$0xff]
      %v822 = vld [vmem:[%s7 + $0x8] sm:$0xff]
      %v823 = vld [vmem:[%s7 + $0x10] sm:$0xff]
      %v824 = vld [vmem:[%s7 + $0x18] sm:$0xff]
      %v825 = vld [vmem:[%s8] sm:$0xff]
      %v826 = vld [vmem:[%s8 + $0x8] sm:$0xff]
      %v827 = vld [vmem:[%s8 + $0x10] sm:$0xff]
      %v828 = vld [vmem:[%s8 + $0x18] sm:$0xff]
      %830 = vset.pattern.permute.xlu0 0
      %831 = vperm.xlu0 %830, %v825
      %v832 = vpop.permute.xlu0 %831
      %835 = vset.pattern.permute.xlu0 0
      %836 = vperm.xlu0 %835, %v826
      %v837 = vpop.permute.xlu0 %836
      %840 = vset.pattern.permute.xlu0 0
      %841 = vperm.xlu0 %840, %v827
      %v842 = vpop.permute.xlu0 %841
      %845 = vset.pattern.permute.xlu0 0
      %846 = vperm.xlu0 %845, %v828
      %v847 = vpop.permute.xlu0 %846
      %v850 = vsel %vm445, %v821, 0
      %v853 = vsel %vm445, %v822, 0
      %v856 = vsel %vm445, %v823, 0
      %v859 = vsel %vm445, %v824, 0
      %861 = vmatpush.msra.mxu0 0.0
      %862 = vmatpush.msra.mxu0 0.0
      %863 = vmatpush.msra.mxu0 0.0
      %864 = vmatpush.msra.mxu0 0.0
      %865 = vmatpush.msra.mxu0 0.0
      %866 = vmatpush.msra.mxu0 0.0
      %867 = vmatpush.msra.mxu0 0.0
      %868 = vmatpush.msra.mxu0 0.0
      %869 = vmatpush.msra.mxu0 0.0
      %870 = vmatpush.msra.mxu0 0.0
      %871 = vmatpush.msra.mxu0 0.0
      %872 = vmatpush.msra.mxu0 0.0
      %873 = vmatpush.msra.mxu0 %v819
      %874 = vmatpush.msra.mxu0 %v817
      %875 = vmatpush.msra.mxu0 %v815
      %876 = vmatpush.msra.mxu0 %v813
      %877 = vmatmul.f32.gmra.mxu0 %v850
      %v878 = vpop.f32.mrf.mxu0
      %v879 = vadd.f32 %v832, %v878
      %880 = vmatmul.f32.gmra.mxu0 %v853
      %v881 = vpop.f32.mrf.mxu0
      %v882 = vadd.f32 %v837, %v881
      %883 = vmatmul.f32.gmra.mxu0 %v856
      %v884 = vpop.f32.mrf.mxu0
      %v885 = vadd.f32 %v842, %v884
      %886 = vmatmul.f32.gmra.mxu0 %v859
      %v887 = vpop.f32.mrf.mxu0
      %v888 = vadd.f32 %v847, %v887
      %889 = vdwg.mxu0
      %890 = vmatpush.msra.mxu0 0.0
      %891 = vmatpush.msra.mxu0 0.0
      %892 = vmatpush.msra.mxu0 0.0
      %893 = vmatpush.msra.mxu0 0.0
      %894 = vmatpush.msra.mxu0 0.0
      %895 = vmatpush.msra.mxu0 0.0
      %896 = vmatpush.msra.mxu0 0.0
      %897 = vmatpush.msra.mxu0 0.0
      %898 = vmatpush.msra.mxu0 0.0
      %899 = vmatpush.msra.mxu0 0.0
      %900 = vmatpush.msra.mxu0 0.0
      %901 = vmatpush.msra.mxu0 0.0
      %902 = vmatpush.msra.mxu0 %v820
      %903 = vmatpush.msra.mxu0 %v818
      %904 = vmatpush.msra.mxu0 %v816
      %905 = vmatpush.msra.mxu0 %v814
      %906 = vmatmul.f32.gmra.mxu0 %v850
      %v907 = vpop.f32.mrf.mxu0
      %v908 = vadd.f32 %v832, %v907
      %909 = vmatmul.f32.gmra.mxu0 %v853
      %v910 = vpop.f32.mrf.mxu0
      %v911 = vadd.f32 %v837, %v910
      %912 = vmatmul.f32.gmra.mxu0 %v856
      %v913 = vpop.f32.mrf.mxu0
      %v914 = vadd.f32 %v842, %v913
      %915 = vmatmul.f32.gmra.mxu0 %v859
      %v916 = vpop.f32.mrf.mxu0
      %v917 = vadd.f32 %v847, %v916
      %918 = vdwg.mxu0
      %919 = vxpose.xlu0.b32.start [1/16] %v879, 128
      %920 = vxpose.xlu0.b32.cont [2/16] %v882, 128
      %921 = vxpose.xlu0.b32.cont [3/16] %v885, 128
      %922 = vxpose.xlu0.b32.cont [4/16] %v888, 128
      %923 = vxpose.xlu0.b32.cont [5/16] 0.0, 128
      %924 = vxpose.xlu0.b32.cont [6/16] 0.0, 128
      %925 = vxpose.xlu0.b32.cont [7/16] 0.0, 128
      %926 = vxpose.xlu0.b32.cont [8/16] 0.0, 128
      %927 = vxpose.xlu0.b32.cont [9/16] 0.0, 128
      %928 = vxpose.xlu0.b32.cont [10/16] 0.0, 128
      %929 = vxpose.xlu0.b32.cont [11/16] 0.0, 128
      %930 = vxpose.xlu0.b32.cont [12/16] 0.0, 128
      %931 = vxpose.xlu0.b32.cont [13/16] 0.0, 128
      %932 = vxpose.xlu0.b32.cont [14/16] 0.0, 128
      %933 = vxpose.xlu0.b32.cont [15/16] 0.0, 128
      %934 = vxpose.xlu0.b32.end [16/16] 0.0, 128
      %v935 = vpop.trf.xlu0
      %v936 = vpop.trf.xlu0
      %v937 = vpop.trf.xlu0
      %v938 = vpop.trf.xlu0
      %v939 = vpop.trf.xlu0
      %v940 = vpop.trf.xlu0
      %v941 = vpop.trf.xlu0
      %v942 = vpop.trf.xlu0
      %v943 = vpop.trf.xlu0
      %v944 = vpop.trf.xlu0
      %v945 = vpop.trf.xlu0
      %v946 = vpop.trf.xlu0
      %v947 = vpop.trf.xlu0
      %v948 = vpop.trf.xlu0
      %v949 = vpop.trf.xlu0
      %v950 = vpop.trf.xlu0
      %951 = vxpose.xlu0.b32.start [1/16] %v908, 128
      %952 = vxpose.xlu0.b32.cont [2/16] %v911, 128
      %953 = vxpose.xlu0.b32.cont [3/16] %v914, 128
      %954 = vxpose.xlu0.b32.cont [4/16] %v917, 128
      %955 = vxpose.xlu0.b32.cont [5/16] 0.0, 128
      %956 = vxpose.xlu0.b32.cont [6/16] 0.0, 128
      %957 = vxpose.xlu0.b32.cont [7/16] 0.0, 128
      %958 = vxpose.xlu0.b32.cont [8/16] 0.0, 128
      %959 = vxpose.xlu0.b32.cont [9/16] 0.0, 128
      %960 = vxpose.xlu0.b32.cont [10/16] 0.0, 128
      %961 = vxpose.xlu0.b32.cont [11/16] 0.0, 128
      %962 = vxpose.xlu0.b32.cont [12/16] 0.0, 128
      %963 = vxpose.xlu0.b32.cont [13/16] 0.0, 128
      %964 = vxpose.xlu0.b32.cont [14/16] 0.0, 128
      %965 = vxpose.xlu0.b32.cont [15/16] 0.0, 128
      %966 = vxpose.xlu0.b32.end [16/16] 0.0, 128
      %v967 = vpop.trf.xlu0
      %v968 = vpop.trf.xlu0
      %v969 = vpop.trf.xlu0
      %v970 = vpop.trf.xlu0
      %v971 = vpop.trf.xlu0
      %v972 = vpop.trf.xlu0
      %v973 = vpop.trf.xlu0
      %v974 = vpop.trf.xlu0
      %v975 = vpop.trf.xlu0
      %v976 = vpop.trf.xlu0
      %v977 = vpop.trf.xlu0
      %v978 = vpop.trf.xlu0
      %v979 = vpop.trf.xlu0
      %v980 = vpop.trf.xlu0
      %v981 = vpop.trf.xlu0
      %v982 = vpop.trf.xlu0
      %983 = vst.msk [vmem:[%s383] sm:$0xff] %vm445, %v935
      %984 = vst.msk [vmem:[%s383 + $0x8] sm:$0xff] %vm445, %v936
      %985 = vst.msk [vmem:[%s383 + $0x10] sm:$0xff] %vm445, %v937
      %986 = vst.msk [vmem:[%s383 + $0x18] sm:$0xff] %vm445, %v938
      %987 = vst.msk [vmem:[%s383 + $0x20] sm:$0xff] %vm445, %v939
      %988 = vst.msk [vmem:[%s383 + $0x28] sm:$0xff] %vm445, %v940
      %989 = vst.msk [vmem:[%s383 + $0x30] sm:$0xff] %vm445, %v941
      %990 = vst.msk [vmem:[%s383 + $0x38] sm:$0xff] %vm445, %v942
      %991 = vst.msk [vmem:[%s383 + $0x40] sm:$0xff] %vm445, %v943
      %992 = vst.msk [vmem:[%s383 + $0x48] sm:$0xff] %vm445, %v944
      %993 = vst.msk [vmem:[%s383 + $0x50] sm:$0xff] %vm445, %v945
      %994 = vst.msk [vmem:[%s383 + $0x58] sm:$0xff] %vm445, %v946
      %995 = vst.msk [vmem:[%s383 + $0x60] sm:$0xff] %vm445, %v947
      %996 = vst.msk [vmem:[%s383 + $0x68] sm:$0xff] %vm445, %v948
      %997 = vst.msk [vmem:[%s383 + $0x70] sm:$0xff] %vm445, %v949
      %998 = vst.msk [vmem:[%s383 + $0x78] sm:$0xff] %vm445, %v950
      %999 = vst.msk [vmem:[%s383 + $0x80] sm:$0xff] %vm445, %v967
      %1000 = vst.msk [vmem:[%s383 + $0x88] sm:$0xff] %vm445, %v968
      %1001 = vst.msk [vmem:[%s383 + $0x90] sm:$0xff] %vm445, %v969
      %1002 = vst.msk [vmem:[%s383 + $0x98] sm:$0xff] %vm445, %v970
      %1003 = vst.msk [vmem:[%s383 + $0xa0] sm:$0xff] %vm445, %v971
      %1004 = vst.msk [vmem:[%s383 + $0xa8] sm:$0xff] %vm445, %v972
      %1005 = vst.msk [vmem:[%s383 + $0xb0] sm:$0xff] %vm445, %v973
      %1006 = vst.msk [vmem:[%s383 + $0xb8] sm:$0xff] %vm445, %v974
      %1007 = vst.msk [vmem:[%s383 + $0xc0] sm:$0xff] %vm445, %v975
      %1008 = vst.msk [vmem:[%s383 + $0xc8] sm:$0xff] %vm445, %v976
      %1009 = vst.msk [vmem:[%s383 + $0xd0] sm:$0xff] %vm445, %v977
      %1010 = vst.msk [vmem:[%s383 + $0xd8] sm:$0xff] %vm445, %v978
      %1011 = vst.msk [vmem:[%s383 + $0xe0] sm:$0xff] %vm445, %v979
      %1012 = vst.msk [vmem:[%s383 + $0xe8] sm:$0xff] %vm445, %v980
      %1013 = vst.msk [vmem:[%s383 + $0xf0] sm:$0xff] %vm445, %v981
      %1014 = vst.msk [vmem:[%s383 + $0xf8] sm:$0xff] %vm445, %v982
      %s1015 = smul.u32 32, %s21
      %p1016 = scmp.lt.s32.totalorder %s1015, 63
      %s1017 = scalar_select %p1016, %s1015, 63
      %s1018 = smul.addr %s1017, 8
      %s1019 = scalar_lea.vmem %s10, %s1018
      // Predicated region
      $region61: #{tpu_custom_call.1} parent=59 // pred_check
        %p1020 = pneg %p259
      $region62: #{tpu_custom_call.1} parent=59 // pred_check_branch
        %1022 = sbr.rel (%p1020) target = $region64
      $region63: #{tpu_custom_call.1} parent=59 // pred_region
        %s1023 = smul.u32 32, %s21
      $region64: #{tpu_custom_call.1} parent=59 // pred_fallthru
        _
    $region60: #{tpu_custom_call.1} parent=5 // pred_fallthru
      _
    %p1024 = scmp.le.s32.totalorder 2, %s16
    // Predicated region
    $region65: #{tpu_custom_call.1} parent=5 // pred_check
      %p1025 = pneg %p1024
    $region66: #{tpu_custom_call.1} parent=5 // pred_check_branch
      %1027 = sbr.rel (%p1025) target = $region68
    $region67: #{tpu_custom_call.1} parent=5 // pred_region
      %s1028 = ssub.s32 %s16, 2
      // Predicated region
      $region69: #{tpu_custom_call.1} parent=67 // pred_check
        %p1029 = pneg %p265
      $region70: #{tpu_custom_call.1} parent=67 // pred_check_branch
        %1031 = sbr.rel (%p1029) target = $region72
      $region71: #{tpu_custom_call.1} parent=67 // pred_region
        %s1032 = smul.u32 32, %s22
        %p1033 = scmp.lt.s32.totalorder %s1032, 63
        %s1034 = scalar_select %p1033, %s1032, 63
        %s1035 = smul.addr %s1034, 8
        %s1036 = scalar_lea.vmem %s10, %s1035
      $region72: #{tpu_custom_call.1} parent=67 // pred_fallthru
        _
    $region68: #{tpu_custom_call.1} parent=5 // pred_fallthru
      _
  $region6: #{tpu_custom_call.1} parent=0 // loop_footer
    %s20 = sadd.s32 1, %s16
  $region7: #{tpu_custom_call.1} parent=0 // loop_footer_branch
    %15 = sbr.rel target = $region3
  $region8: #{tpu_custom_call.1} parent=0 // loop_exit
    _

</llo_original>
